<compile_context>
chip_gen: v7x
topology: tpu7x:2x2x1
jax: 0.10.0
libtpu: 0.0.40
codegen_flags: <defaults>
</compile_context>

<pallas_src>
import jax
import jax.numpy as jnp
from jax import lax
from jax.experimental import pallas as pl
from jax.experimental.pallas import tpu as pltpu


def fused_gram_fc_kernel(x_ref, wt_ref, b_ref, o_ref, g_ref):
    # x_ref : (Bt, C, HW)   batch block of the flattened input
    # wt_ref: (CC, tn)      FC weight tile, (in, out)-major
    # b_ref : (1, tn)       bias tile
    # o_ref : (Bt, tn)      output block
    # g_ref : (Bt, CC) f32  scratch: flattened Gram matrices; persists across
    #                       the inner weight-N grid axis.
    j = pl.program_id(1)

    @pl.when(j == 0)
    def _():
        x = x_ref[...]
        bt, c, hw = x.shape
        # Batched Gram: contract the lane (HW) dim of x with itself on the
        # MXU (no explicit transpose); fold the 1/(H*W) scale as a multiply.
        g = lax.dot_general(
            x, x,
            dimension_numbers=(((2,), (2,)), ((0,), (0,))),
            preferred_element_type=jnp.float32,
        ) * (1.0 / hw)                                  # (Bt, C, C) f32
        # Row-major flatten == torch's .view(b, -1).
        g_ref[...] = g.reshape(bt, c * c)

    # FC tile: a single (Bt, CC) @ (CC, tn) matmul + bias (no per-row loop).
    y = jnp.dot(g_ref[...], wt_ref[...], preferred_element_type=jnp.float32)
    y = y + b_ref[...].astype(jnp.float32)
    o_ref[...] = y.astype(o_ref.dtype)


def prepare_fc_weight(weight):
    """One-time prep (hoist out of the hot path): PyTorch nn.Linear weight
    (out_features, in_features) -> (in_features, out_features)."""
    return jnp.asarray(weight).T


def get_fc_matrix(x, weight_t, bias):
    """x: (B, C, H, W); weight_t: (C*C, C*C) pre-transposed Linear weight
    (in-features major, see prepare_fc_weight); bias: (C*C,).
    Returns (B, C, C)."""
    b, c, h, w = x.shape
    hw = h * w
    cc = c * c
    assert weight_t.shape == (cc, cc)

    xf = x.reshape(b, c, hw)
    bias2 = bias.reshape(1, cc)

    itemsize = x.dtype.itemsize
    w_itemsize = weight_t.dtype.itemsize

    # Batch block: fold the whole batch into one grid step when its x slab is
    # small (the common case here); otherwise block B in sublane-aligned
    # chunks of 8.
    if b <= 8 or b * c * hw * itemsize <= 4 * (1 << 20):
        bt = b
    else:
        bt = 8
    nb = pl.cdiv(b, bt)

    # Weight output-dim tile: keep the whole weight resident when it
    # (double-buffered) fits a modest VMEM budget; otherwise tile N in 512
    # lanes (multiple of 128 => valid on v5e/v6e/v7x MXUs).
    if cc < 512 or 2 * cc * cc * w_itemsize <= 16 * (1 << 20):
        tn = cc
    else:
        tn = 512
    nn = pl.cdiv(cc, tn)

    vmem_bytes = (
        2 * (bt * c * hw * itemsize            # x block (double-buffered)
             + cc * tn * w_itemsize            # weight tile
             + tn * bias.dtype.itemsize        # bias tile
             + bt * tn * itemsize)             # output block
        + bt * cc * 4                          # Gram scratch (f32)
    )
    vmem_limit = min(max(2 * vmem_bytes, 32 * (1 << 20)), 100 * (1 << 20))

    out = pl.pallas_call(
        fused_gram_fc_kernel,
        out_shape=jax.ShapeDtypeStruct((b, cc), x.dtype),
        grid=(nb, nn),                                   # N-tiles innermost
        in_specs=[
            pl.BlockSpec((bt, c, hw), lambda i, j: (i, 0, 0)),
            pl.BlockSpec((cc, tn), lambda i, j: (0, j)),   # weight tile
            pl.BlockSpec((1, tn), lambda i, j: (0, j)),    # bias tile
        ],
        out_specs=pl.BlockSpec((bt, tn), lambda i, j: (i, j)),
        scratch_shapes=[pltpu.VMEM((bt, cc), jnp.float32)],
        compiler_params=pltpu.CompilerParams(
            dimension_semantics=("parallel", "arbitrary"),
            vmem_limit_bytes=int(vmem_limit),
        ),
    )(xf, weight_t, bias2)

    return out.reshape(b, c, c)


def reference(x, weight, bias):
    b, c, h, w = x.shape
    xf = x.reshape(b, c, h * w)
    gram = jnp.einsum("bcn,bdn->bcd", xf, xf) / (h * w)
    y = gram.reshape(b, c * c) @ weight.T + bias
    return y.reshape(b, c, c)


if __name__ == "__main__":
    B, C, H, W = 2, 4, 16, 16
    CC = C * C

    key = jax.random.PRNGKey(0)
    kx, kw, kb = jax.random.split(key, 3)

    x = jax.random.normal(kx, (B, C, H, W), dtype=jnp.float32)

    # Deterministic nn.Linear-style init: U(-1/sqrt(in), 1/sqrt(in)).
    bound = 1.0 / jnp.sqrt(float(CC))
    weight = jax.random.uniform(kw, (CC, CC), jnp.float32, -bound, bound)
    bias = jax.random.uniform(kb, (CC,), jnp.float32, -bound, bound)

    # Weight transpose is done ONCE outside the hot path.
    weight_t = prepare_fc_weight(weight)

    out = get_fc_matrix(x, weight_t, bias)
    out = jax.block_until_ready(out)

    ref = reference(x, weight, bias)
    assert out.shape == (B, C, C)
    assert jnp.allclose(out, ref, atol=1e-4, rtol=1e-4)

    print("KERNEL_OK")
</pallas_src>

<mosaic_0001>
module attributes {stable_mosaic.version = 11 : i64} {
  func.func @fused_gram_fc_kernel(%arg0: i32, %arg1: i32, %arg2: memref<2x4x256xf32, #tpu.memory_space<vmem>>, %arg3: memref<16x16xf32, #tpu.memory_space<vmem>>, %arg4: memref<1x16xf32, #tpu.memory_space<vmem>>, %arg5: memref<2x16xf32, #tpu.memory_space<vmem>>, %arg6: memref<2x16xf32, #tpu.memory_space<vmem>>) attributes {dimension_semantics = [#tpu.dimension_semantics<parallel>, #tpu.dimension_semantics<arbitrary>], iteration_bounds = array<i64: 1, 1>, scalar_prefetch = 0 : i64, scratch_operands = 1 : i64, tpu.core_type = #tpu.core_type<tc>, window_params = [{transform_indices = @transform_0, window_bounds = array<i64: 2, 4, 256>}, {transform_indices = @transform_1, window_bounds = array<i64: 16, 16>}, {transform_indices = @transform_2, window_bounds = array<i64: 1, 16>}, {transform_indices = @transform_3, window_bounds = array<i64: 2, 16>}]} {
    %c0_i32 = arith.constant 0 : i32
    %0 = arith.cmpi eq, %arg1, %c0_i32 : i32
    %1 = arith.extui %0 : i1 to i32
    %c0_i32_0 = arith.constant 0 : i32
    %2 = arith.cmpi ne, %1, %c0_i32_0 : i32
    scf.if %2 {
      %c0_8 = arith.constant 0 : index
      %c0_9 = arith.constant 0 : index
      %c0_10 = arith.constant 0 : index
      %10 = vector.load %arg2[%c0_8, %c0_9, %c0_10] : memref<2x4x256xf32, #tpu.memory_space<vmem>>, vector<2x4x256xf32>
      %cst_11 = arith.constant dense<0.000000e+00> : vector<2x4x4xf32>
      %11 = tpu.matmul %10, %10, %cst_11 {dimension_numbers = #tpu.dot_dimension_numbers<[2], [2], [1], [1], [0, 0, 0, 1, 1, 1], [0], [0]>} : vector<2x4x256xf32>, vector<2x4x256xf32>, vector<2x4x4xf32> -> vector<2x4x4xf32>
      %cst_12 = arith.constant 3.906250e-03 : f32
      %12 = vector.broadcast %cst_12 : f32 to vector<2x4x4xf32>
      %13 = arith.mulf %11, %12 : vector<2x4x4xf32>
      %14 = vector.shape_cast %13 : vector<2x4x4xf32> to vector<2x16xf32>
      %c0_13 = arith.constant 0 : index
      %c0_14 = arith.constant 0 : index
      %15 = vector.load %arg6[%c0_13, %c0_14] : memref<2x16xf32, #tpu.memory_space<vmem>>, vector<2x16xf32>
      tpu.vector_store %arg6[%c0_13, %c0_14], %14 {strides = array<i32>} : memref<2x16xf32, #tpu.memory_space<vmem>>, vector<2x16xf32>,
    } else {
    }
    %c0 = arith.constant 0 : index
    %c0_1 = arith.constant 0 : index
    %3 = vector.load %arg6[%c0, %c0_1] : memref<2x16xf32, #tpu.memory_space<vmem>>, vector<2x16xf32>
    %c0_2 = arith.constant 0 : index
    %c0_3 = arith.constant 0 : index
    %4 = vector.load %arg3[%c0_2, %c0_3] : memref<16x16xf32, #tpu.memory_space<vmem>>, vector<16x16xf32>
    %cst = arith.constant dense<0.000000e+00> : vector<2x16xf32>
    %5 = tpu.matmul %3, %4, %cst {dimension_numbers = #tpu.dot_dimension_numbers<[1], [0], [0], [1], [0, 0, 1, 1], [], []>} : vector<2x16xf32>, vector<16x16xf32>, vector<2x16xf32> -> vector<2x16xf32>
    %c0_4 = arith.constant 0 : index
    %c0_5 = arith.constant 0 : index
    %6 = vector.load %arg4[%c0_4, %c0_5] : memref<1x16xf32, #tpu.memory_space<vmem>>, vector<1x16xf32>
    %7 = vector.broadcast %6 : vector<1x16xf32> to vector<2x16xf32>
    %8 = arith.addf %5, %7 : vector<2x16xf32>
    %c0_6 = arith.constant 0 : index
    %c0_7 = arith.constant 0 : index
    %9 = vector.load %arg5[%c0_6, %c0_7] : memref<2x16xf32, #tpu.memory_space<vmem>>, vector<2x16xf32>
    tpu.vector_store %arg5[%c0_6, %c0_7], %8 {strides = array<i32>} : memref<2x16xf32, #tpu.memory_space<vmem>>, vector<2x16xf32>,
    return
  }
  func.func @transform_0(%arg0: i32, %arg1: i32) -> (i32, i32, i32) {
    %c0_i32 = arith.constant 0 : i32
    %c0_i32_0 = arith.constant 0 : i32
    %c0_i32_1 = arith.constant 0 : i32
    return %arg0, %c0_i32, %c0_i32_0 : i32, i32, i32
  }
  func.func @transform_1(%arg0: i32, %arg1: i32) -> (i32, i32) {
    %c0_i32 = arith.constant 0 : i32
    %c0_i32_0 = arith.constant 0 : i32
    return %c0_i32, %arg1 : i32, i32
  }
  func.func @transform_2(%arg0: i32, %arg1: i32) -> (i32, i32) {
    %c0_i32 = arith.constant 0 : i32
    %c0_i32_0 = arith.constant 0 : i32
    return %c0_i32, %arg1 : i32, i32
  }
  func.func @transform_3(%arg0: i32, %arg1: i32) -> (i32, i32) {
    %c0_i32 = arith.constant 0 : i32
    return %arg0, %arg1 : i32, i32
  }
}

</mosaic_0001>

<llo_original>
// kernel: tpu_custom_call.1
$region0: #{tpu_custom_call.1}
  #allocation0 [shape = 'u32[]', space=smem, size = 0x4, offset = 0x4, fixed_abs, tag = 'smem constant byte address 0x4 - core index']
  #allocation1 [shape = 'u32[144,128]{1,0:T(1,128)}', space=vmem, size = 0x12000, scoped, tag = 'internal scratch']
  #allocation2 [shape = 'f32[2,16]{1,0:T(2,128)}', space=vmem, size = 0x400, scoped, tag = 'scratch operand']
  %s0 = inlined_call_operand.hbm [shape: f32[2,4,256], index: 0, kind: input, shape index: {}]
  %s1 = inlined_call_operand.hbm [shape: f32[16,16], index: 1, kind: input, shape index: {}]
  %s2 = inlined_call_operand.vmem [shape: f32[1,16], index: 2, kind: input, shape index: {}]
  %s3 = inlined_call_operand.hbm [shape: f32[2,16], index: 3, kind: output, shape index: {}]
  %s4 = sld [smem:[#allocation0]]
  $region34: #{tpu_custom_call.1} parent=0
    _
  %s6 = ssub.s32 1, %s4
  %s7 = scalar_select 0, %s6, %s4
  $region1: #{tpu_custom_call.1} parent=0
    #allocation3 [shape = 'u8[8192]{0}', space=vmem, size = 0x2000, scoped, tag = 'input window, operand 0, single buffered']
    #allocation4 [shape = 's32[1]{0}', space=sflag, size = 0x4, scoped, tag = 'scoped memory for tpu_custom_call.1']
    #allocation5 [shape = 's32[1]{0}', space=sflag, size = 0x4, scoped, tag = 'scoped memory for tpu_custom_call.1']
    #allocation6 [shape = 'u8[8192]{0}', space=vmem, size = 0x2000, scoped, tag = 'input window, operand 1, single buffered']
    #allocation7 [shape = 's32[1]{0}', space=sflag, size = 0x4, scoped, tag = 'scoped memory for tpu_custom_call.1']
    #allocation8 [shape = 'u8[1024]{0}', space=vmem, size = 0x400, scoped, tag = 'output window, operand 0, single buffered']
    %8 = vsyncpa [#allocation4], 0
    %9 = vsyncpa [#allocation7], 0
    %10 = vsyncpa [#allocation5], 0
    // Predicated region
    $region2: #{tpu_custom_call.1} parent=1 // pred_check
      _
    $region3: #{tpu_custom_call.1} parent=1 // pred_check_branch
      %12 = sbr.rel (0) target = $region5
    $region4: #{tpu_custom_call.1} parent=1 // pred_region
      %s14 = ssub.s32 256, 256
      %15 = vsyncadd [#allocation4], %s14
      %s16 = sshll.u32 [#allocation3], 4
      %s17 = int_to_ptr.vmem [resolvable:$true] %s16
      %22 = dma.hbm_to_vmem [thread:$0]  %s0, 256, %s17, [#allocation4], 128, 128, 8
    $region5: #{tpu_custom_call.1} parent=1 // pred_fallthru
      _
    // Predicated region
    $region6: #{tpu_custom_call.1} parent=1 // pred_check
      _
    $region7: #{tpu_custom_call.1} parent=1 // pred_check_branch
      %24 = sbr.rel (0) target = $region9
    $region8: #{tpu_custom_call.1} parent=1 // pred_region
      %s26 = ssub.s32 256, 256
      %27 = vsyncadd [#allocation7], %s26
      %s28 = sshll.u32 [#allocation6], 4
      %s29 = int_to_ptr.vmem [resolvable:$true] %s28
      %34 = dma.hbm_to_vmem [thread:$0]  %s1, 256, %s29, [#allocation7], 128, 128, 8
    $region9: #{tpu_custom_call.1} parent=1 // pred_fallthru
      _
    // Predicated region
    $region10: #{tpu_custom_call.1} parent=1 // pred_check
      _
    $region11: #{tpu_custom_call.1} parent=1 // pred_check_branch
      %36 = sbr.rel (0) target = $region13
    $region12: #{tpu_custom_call.1} parent=1 // pred_region
      _
    $region13: #{tpu_custom_call.1} parent=1 // pred_fallthru
      _
    // Predicated region
    $region14: #{tpu_custom_call.1} parent=1 // pred_check
      _
    $region15: #{tpu_custom_call.1} parent=1 // pred_check_branch
      %38 = sbr.rel (0) target = $region17
    $region16: #{tpu_custom_call.1} parent=1 // pred_region
      %39 = dma.done [#allocation4], 256
    $region17: #{tpu_custom_call.1} parent=1 // pred_fallthru
      _
    // Predicated region
    $region18: #{tpu_custom_call.1} parent=1 // pred_check
      _
    $region19: #{tpu_custom_call.1} parent=1 // pred_check_branch
      %41 = sbr.rel (0) target = $region21
    $region20: #{tpu_custom_call.1} parent=1 // pred_region
      %42 = dma.done [#allocation7], 256
    $region21: #{tpu_custom_call.1} parent=1 // pred_fallthru
      _
    %p43 = scmp.eq.s32.totalorder 0, 0
    // Predicated region
    $region22: #{tpu_custom_call.1} parent=1 // pred_check
      %p44 = pneg %p43
    $region23: #{tpu_custom_call.1} parent=1 // pred_check_branch
      %46 = sbr.rel (%p44) target = $region25
    $region24: #{tpu_custom_call.1} parent=1 // pred_region
      %v47 = vld [vmem:[#allocation3] sm:$0xff]
      %v48 = vld [vmem:[#allocation3 + $0x8] sm:$0xff]
      %v50 = vcombine.high %v47, %v47
      %52 = vmatprep.subr.mxu0 %v50
      %53 = vmatpush1.xpose.msra.mxu0 %v47
      %54 = vmatprep.subr.mxu0 0.0
      %55 = vmatpush1.xpose.msra.mxu0 0.0
      %56 = vmatprep.subr.mxu0 0.0
      %57 = vmatpush1.xpose.msra.mxu0 0.0
      %58 = vmatprep.subr.mxu0 0.0
      %59 = vmatpush1.xpose.msra.mxu0 0.0
      %60 = vmatprep.subr.mxu0 0.0
      %61 = vmatpush1.xpose.msra.mxu0 0.0
      %62 = vmatprep.subr.mxu0 0.0
      %63 = vmatpush1.xpose.msra.mxu0 0.0
      %64 = vmatprep.subr.mxu0 0.0
      %65 = vmatpush1.xpose.msra.mxu0 0.0
      %66 = vmatprep.subr.mxu0 0.0
      %67 = vmatpush1.xpose.msra.mxu0 0.0
      %68 = vmatprep.subr.mxu0 0.0
      %69 = vmatpush1.xpose.msra.mxu0 0.0
      %70 = vmatprep.subr.mxu0 0.0
      %71 = vmatpush1.xpose.msra.mxu0 0.0
      %72 = vmatprep.subr.mxu0 0.0
      %73 = vmatpush1.xpose.msra.mxu0 0.0
      %74 = vmatprep.subr.mxu0 0.0
      %75 = vmatpush1.xpose.msra.mxu0 0.0
      %76 = vmatprep.subr.mxu0 0.0
      %77 = vmatpush1.xpose.msra.mxu0 0.0
      %78 = vmatprep.subr.mxu0 0.0
      %79 = vmatpush1.xpose.msra.mxu0 0.0
      %80 = vmatprep.subr.mxu0 0.0
      %81 = vmatpush1.xpose.msra.mxu0 0.0
      %82 = vmatprep.subr.mxu0 0.0
      %83 = vmatpush1.xpose.msra.mxu0 0.0
      %84 = vmatprep.subr.mxu0 0.0
      %85 = vmatpush1.xpose.msra.mxu0 0.0
      %86 = vmatprep.subr.mxu0 0.0
      %87 = vmatpush1.xpose.msra.mxu0 0.0
      %88 = vmatprep.subr.mxu0 0.0
      %89 = vmatpush1.xpose.msra.mxu0 0.0
      %90 = vmatprep.subr.mxu0 0.0
      %91 = vmatpush1.xpose.msra.mxu0 0.0
      %92 = vmatprep.subr.mxu0 0.0
      %93 = vmatpush1.xpose.msra.mxu0 0.0
      %94 = vmatprep.subr.mxu0 0.0
      %95 = vmatpush1.xpose.msra.mxu0 0.0
      %96 = vmatprep.subr.mxu0 0.0
      %97 = vmatpush1.xpose.msra.mxu0 0.0
      %98 = vmatprep.subr.mxu0 0.0
      %99 = vmatpush1.xpose.msra.mxu0 0.0
      %100 = vmatprep.subr.mxu0 0.0
      %101 = vmatpush1.xpose.msra.mxu0 0.0
      %102 = vmatprep.subr.mxu0 0.0
      %103 = vmatpush1.xpose.msra.mxu0 0.0
      %104 = vmatprep.subr.mxu0 0.0
      %105 = vmatpush1.xpose.msra.mxu0 0.0
      %106 = vmatprep.subr.mxu0 0.0
      %107 = vmatpush1.xpose.msra.mxu0 0.0
      %108 = vmatprep.subr.mxu0 0.0
      %109 = vmatpush1.xpose.msra.mxu0 0.0
      %110 = vmatprep.subr.mxu0 0.0
      %111 = vmatpush1.xpose.msra.mxu0 0.0
      %112 = vmatprep.subr.mxu0 0.0
      %113 = vmatpush1.xpose.msra.mxu0 0.0
      %114 = vmatprep.subr.mxu0 0.0
      %115 = vmatpush1.xpose.msra.mxu0 0.0
      %116 = vmatprep.mubr.f32.mxu0 %v50
      %117 = vmatmul.mubr.f32.gmra.mrb[0].mxu0 %v47
      %v118 = vpop.f32.mrb[0].mxu0
      %v119 = vadd.f32 0.0, %v118
      %v120 = vpop.f32.mrb[0].mxu0
      %121 = vdwg.mxu0
      %v123 = vcombine.high %v48, %v48
      %125 = vmatprep.subr.mxu0 %v123
      %126 = vmatpush1.xpose.msra.mxu0 %v48
      %127 = vmatprep.subr.mxu0 0.0
      %128 = vmatpush1.xpose.msra.mxu0 0.0
      %129 = vmatprep.subr.mxu0 0.0
      %130 = vmatpush1.xpose.msra.mxu0 0.0
      %131 = vmatprep.subr.mxu0 0.0
      %132 = vmatpush1.xpose.msra.mxu0 0.0
      %133 = vmatprep.subr.mxu0 0.0
      %134 = vmatpush1.xpose.msra.mxu0 0.0
      %135 = vmatprep.subr.mxu0 0.0
      %136 = vmatpush1.xpose.msra.mxu0 0.0
      %137 = vmatprep.subr.mxu0 0.0
      %138 = vmatpush1.xpose.msra.mxu0 0.0
      %139 = vmatprep.subr.mxu0 0.0
      %140 = vmatpush1.xpose.msra.mxu0 0.0
      %141 = vmatprep.subr.mxu0 0.0
      %142 = vmatpush1.xpose.msra.mxu0 0.0
      %143 = vmatprep.subr.mxu0 0.0
      %144 = vmatpush1.xpose.msra.mxu0 0.0
      %145 = vmatprep.subr.mxu0 0.0
      %146 = vmatpush1.xpose.msra.mxu0 0.0
      %147 = vmatprep.subr.mxu0 0.0
      %148 = vmatpush1.xpose.msra.mxu0 0.0
      %149 = vmatprep.subr.mxu0 0.0
      %150 = vmatpush1.xpose.msra.mxu0 0.0
      %151 = vmatprep.subr.mxu0 0.0
      %152 = vmatpush1.xpose.msra.mxu0 0.0
      %153 = vmatprep.subr.mxu0 0.0
      %154 = vmatpush1.xpose.msra.mxu0 0.0
      %155 = vmatprep.subr.mxu0 0.0
      %156 = vmatpush1.xpose.msra.mxu0 0.0
      %157 = vmatprep.subr.mxu0 0.0
      %158 = vmatpush1.xpose.msra.mxu0 0.0
      %159 = vmatprep.subr.mxu0 0.0
      %160 = vmatpush1.xpose.msra.mxu0 0.0
      %161 = vmatprep.subr.mxu0 0.0
      %162 = vmatpush1.xpose.msra.mxu0 0.0
      %163 = vmatprep.subr.mxu0 0.0
      %164 = vmatpush1.xpose.msra.mxu0 0.0
      %165 = vmatprep.subr.mxu0 0.0
      %166 = vmatpush1.xpose.msra.mxu0 0.0
      %167 = vmatprep.subr.mxu0 0.0
      %168 = vmatpush1.xpose.msra.mxu0 0.0
      %169 = vmatprep.subr.mxu0 0.0
      %170 = vmatpush1.xpose.msra.mxu0 0.0
      %171 = vmatprep.subr.mxu0 0.0
      %172 = vmatpush1.xpose.msra.mxu0 0.0
      %173 = vmatprep.subr.mxu0 0.0
      %174 = vmatpush1.xpose.msra.mxu0 0.0
      %175 = vmatprep.subr.mxu0 0.0
      %176 = vmatpush1.xpose.msra.mxu0 0.0
      %177 = vmatprep.subr.mxu0 0.0
      %178 = vmatpush1.xpose.msra.mxu0 0.0
      %179 = vmatprep.subr.mxu0 0.0
      %180 = vmatpush1.xpose.msra.mxu0 0.0
      %181 = vmatprep.subr.mxu0 0.0
      %182 = vmatpush1.xpose.msra.mxu0 0.0
      %183 = vmatprep.subr.mxu0 0.0
      %184 = vmatpush1.xpose.msra.mxu0 0.0
      %185 = vmatprep.subr.mxu0 0.0
      %186 = vmatpush1.xpose.msra.mxu0 0.0
      %187 = vmatprep.subr.mxu0 0.0
      %188 = vmatpush1.xpose.msra.mxu0 0.0
      %189 = vmatprep.mubr.f32.mxu0 %v123
      %190 = vmatmul.mubr.f32.gmra.mrb[0].mxu0 %v48
      %v191 = vpop.f32.mrb[0].mxu0
      %v192 = vadd.f32 0.0, %v191
      %v193 = vpop.f32.mrb[0].mxu0
      %194 = vdwg.mxu0
      %v195 = vmul.f32 %v119, 0.00390625
      %v197 = vunpack.c.l.s4 1983009808
      %v198 = vunpack.c.0.s8 %v197
      %v199 = vlaneseq
      %v200 = vshrl.u32 %v199, 7
      %v201 = vsub.s32 %v198, %v200
      %v202 = vrot.slane %v195, %v201
      %v203 = vmul.f32 %v192, 0.00390625
      %v205 = vunpack.c.l.s4 1983009808
      %v206 = vunpack.c.0.s8 %v205
      %v207 = vlaneseq
      %v208 = vshrl.u32 %v207, 7
      %v209 = vsub.s32 %v206, %v208
      %v210 = vrot.slane %v203, %v209
      %v211 = vcombine.low %v202, %v210
      %v212 = vcombine.high %v202, %v210
      %v214 = vunpack.c.l.s4 1934713408
      %v215 = vunpack.c.0.s8 %v214
      %v216 = vlaneseq
      %v217 = vshrl.u32 %v216, 7
      %v218 = vsub.s32 %v215, %v217
      %v219 = vrot.slane %v211, %v218
      %v221 = vunpack.c.l.s4 1934713408
      %v222 = vunpack.c.0.s8 %v221
      %v223 = vlaneseq
      %v224 = vshrl.u32 %v223, 7
      %v225 = vsub.s32 %v222, %v224
      %v226 = vrot.slane %v212, %v225
      %v227 = vcombine.high %v219, 0.0
      %v228 = vcombine.high %v226, 0.0
      %230 = vrot.lane.b32.xlu0 %v227, 4
      %v231 = vpop.permute.xlu0 %230
      %234 = vrot.lane.b32.xlu0 %v226, 8
      %v235 = vpop.permute.xlu0 %234
      %238 = vrot.lane.b32.xlu0 %v228, 12
      %v239 = vpop.permute.xlu0 %238
      %vm241 = vcmask 31744
      %v242 = vsel %vm241, %v219, %v231
      %vm243 = vcmask 64512
      %v244 = vsel %vm243, %v242, %v235
      %vm245 = vcmask 97280
      %v246 = vsel %vm245, %v244, %v239
      %vm247 = vcmask 123904
      %248 = vst.msk [vmem:[#allocation2] sm:$0x3] %vm247, %v246
    $region25: #{tpu_custom_call.1} parent=1 // pred_fallthru
      _
    %v249 = vld [vmem:[#allocation2] sm:$0x3]
    %v250 = vld [vmem:[#allocation6] sm:$0xff]
    %v251 = vld [vmem:[#allocation6 + $0x8] sm:$0xff]
    %v252 = vld [vmem:[%s2] sm:$0x1]
    %v254 = vlaneseq
    %v255 = vshrl.u32 %v254, 7
    %v256 = vsub.s32 0, %v255
    %v257 = vrot.slane %v252, %v256
    %vm259 = vcmask 130048
    %v261 = vsel %vm259, %v249, 0
    %263 = vmatprep.subr.mxu0 0.0
    %264 = vmatpush1.msra.mxu0 %v250
    %265 = vmatprep.subr.mxu0 0.0
    %266 = vmatpush1.msra.mxu0 %v251
    %267 = vmatprep.subr.mxu0 0.0
    %268 = vmatpush1.msra.mxu0 0.0
    %269 = vmatprep.subr.mxu0 0.0
    %270 = vmatpush1.msra.mxu0 0.0
    %271 = vmatprep.subr.mxu0 0.0
    %272 = vmatpush1.msra.mxu0 0.0
    %273 = vmatprep.subr.mxu0 0.0
    %274 = vmatpush1.msra.mxu0 0.0
    %275 = vmatprep.subr.mxu0 0.0
    %276 = vmatpush1.msra.mxu0 0.0
    %277 = vmatprep.subr.mxu0 0.0
    %278 = vmatpush1.msra.mxu0 0.0
    %279 = vmatprep.subr.mxu0 0.0
    %280 = vmatpush1.msra.mxu0 0.0
    %281 = vmatprep.subr.mxu0 0.0
    %282 = vmatpush1.msra.mxu0 0.0
    %283 = vmatprep.subr.mxu0 0.0
    %284 = vmatpush1.msra.mxu0 0.0
    %285 = vmatprep.subr.mxu0 0.0
    %286 = vmatpush1.msra.mxu0 0.0
    %287 = vmatprep.subr.mxu0 0.0
    %288 = vmatpush1.msra.mxu0 0.0
    %289 = vmatprep.subr.mxu0 0.0
    %290 = vmatpush1.msra.mxu0 0.0
    %291 = vmatprep.subr.mxu0 0.0
    %292 = vmatpush1.msra.mxu0 0.0
    %293 = vmatprep.subr.mxu0 0.0
    %294 = vmatpush1.msra.mxu0 0.0
    %295 = vmatprep.subr.mxu0 0.0
    %296 = vmatpush1.msra.mxu0 0.0
    %297 = vmatprep.subr.mxu0 0.0
    %298 = vmatpush1.msra.mxu0 0.0
    %299 = vmatprep.subr.mxu0 0.0
    %300 = vmatpush1.msra.mxu0 0.0
    %301 = vmatprep.subr.mxu0 0.0
    %302 = vmatpush1.msra.mxu0 0.0
    %303 = vmatprep.subr.mxu0 0.0
    %304 = vmatpush1.msra.mxu0 0.0
    %305 = vmatprep.subr.mxu0 0.0
    %306 = vmatpush1.msra.mxu0 0.0
    %307 = vmatprep.subr.mxu0 0.0
    %308 = vmatpush1.msra.mxu0 0.0
    %309 = vmatprep.subr.mxu0 0.0
    %310 = vmatpush1.msra.mxu0 0.0
    %311 = vmatprep.subr.mxu0 0.0
    %312 = vmatpush1.msra.mxu0 0.0
    %313 = vmatprep.subr.mxu0 0.0
    %314 = vmatpush1.msra.mxu0 0.0
    %315 = vmatprep.subr.mxu0 0.0
    %316 = vmatpush1.msra.mxu0 0.0
    %317 = vmatprep.subr.mxu0 0.0
    %318 = vmatpush1.msra.mxu0 0.0
    %319 = vmatprep.subr.mxu0 0.0
    %320 = vmatpush1.msra.mxu0 0.0
    %321 = vmatprep.subr.mxu0 0.0
    %322 = vmatpush1.msra.mxu0 0.0
    %323 = vmatprep.subr.mxu0 0.0
    %324 = vmatpush1.msra.mxu0 0.0
    %325 = vmatprep.subr.mxu0 0.0
    %326 = vmatpush1.msra.mxu0 0.0
    %327 = vmatprep.mubr.f32.mxu0 0.0
    %328 = vmatmul.mubr.f32.gmra.mrb[0].mxu0 %v261
    %v329 = vpop.f32.mrb[0].mxu0
    %v330 = vadd.f32 %v257, %v329
    %v331 = vpop.f32.mrb[0].mxu0
    %332 = vdwg.mxu0
    %vm333 = vcmask 123904
    %334 = vst.msk [vmem:[#allocation8] sm:$0x3] %vm333, %v330
    // Predicated region
    $region26: #{tpu_custom_call.1} parent=1 // pred_check
      _
    $region27: #{tpu_custom_call.1} parent=1 // pred_check_branch
      %336 = sbr.rel (0) target = $region29
    $region28: #{tpu_custom_call.1} parent=1 // pred_region
      %s338 = ssub.s32 32, 32
      %339 = vsyncadd [#allocation5], %s338
      %s341 = sshll.u32 [#allocation8], 4
      %s342 = int_to_ptr.vmem [resolvable:$true] %s341
      %344 = dma.vmem_to_hbm [thread:$0]  %s342, 32, %s3, [#allocation5]
    $region29: #{tpu_custom_call.1} parent=1 // pred_fallthru
      _
    // Predicated region
    $region30: #{tpu_custom_call.1} parent=1 // pred_check
      _
    $region31: #{tpu_custom_call.1} parent=1 // pred_check_branch
      %346 = sbr.rel (0) target = $region33
    $region32: #{tpu_custom_call.1} parent=1 // pred_region
      %347 = dma.done [#allocation5], 32
    $region33: #{tpu_custom_call.1} parent=1 // pred_fallthru
      _
    %348 = vsyncpa [#allocation4], 1
    %349 = vsyncpa [#allocation7], 1
    %350 = vsyncpa [#allocation5], 1

</llo_original>
